<compile_context>
chip_gen: v7x
topology: tpu7x:2x2x1
jax: 0.10.0
libtpu: 0.0.40
codegen_flags: <defaults>
</compile_context>

<pallas_src>
import functools

import jax
import jax.numpy as jnp
from jax.experimental import pallas as pl
from jax.experimental.pallas import tpu as pltpu

SELU_ALPHA = 1.6732632423543772
SELU_SCALE = 1.0507009873554805
DROPOUT_P = 0.5          # F.dropout(p=0.5), default training=True -> always on
MASK_FILL = -999999.0


def _dropout_keep_mask(shape, seed_i32, salt):
    """Bernoulli(0.5) keep-mask from a counter-based integer hash.

    Pure jnp integer ops (iota / mul / xor / shift), so it works on the Mosaic
    TPU backend and on the CPU interpret path, unlike pltpu.prng_*.
    """
    s = (seed_i32.astype(jnp.uint32) * jnp.uint32(0x9E3779B1)
         + jnp.uint32(salt) * jnp.uint32(0x85EBCA77))
    r = jax.lax.broadcasted_iota(jnp.uint32, shape, 0)
    c = jax.lax.broadcasted_iota(jnp.uint32, shape, 1)
    x = s + r * jnp.uint32(0x9E3779B9) + c * jnp.uint32(0xC2B2AE35)
    x = x ^ (x >> 16)
    x = x * jnp.uint32(0x7FEB352D)
    x = x ^ (x >> 15)
    x = x * jnp.uint32(0x846CA68B)
    x = x ^ (x >> 16)
    return (x >> 31) == 0        # keep with probability 0.5


def _selu_dropout(x, keep):
    # SELU followed by inverted dropout; 1/(1-p) folded into the SELU scale.
    act = jnp.where(x > 0.0, x, SELU_ALPHA * (jnp.exp(x) - 1.0))
    return jnp.where(keep, (SELU_SCALE / (1.0 - DROPOUT_P)) * act, 0.0)


def _actor_critic_kernel(act_dim,
                         seed_ref,                       # scalar prefetch (SMEM)
                         state_ref, mask_ref,
                         w1_ref, b1_ref, w2_ref, b2_ref,
                         wh_ref, bh_ref,                  # fused actor|critic head
                         out_ref):
    # Decorrelate dropout across batch tiles / megacore shards.
    seed = seed_ref[0] + pl.program_id(0)

    x = state_ref[...]                                    # [TB, state_dim]

    # l1 -> selu -> dropout
    h = jnp.dot(x, w1_ref[...], preferred_element_type=jnp.float32) + b1_ref[...]
    h = _selu_dropout(h, _dropout_keep_mask(h.shape, seed, 1))

    # l2 -> selu -> dropout
    h = jnp.dot(h, w2_ref[...], preferred_element_type=jnp.float32) + b2_ref[...]
    h = _selu_dropout(h, _dropout_keep_mask(h.shape, seed, 2))

    # Fused actor|critic head: one MXU pass over [h1, act_dim + 1].
    head = jnp.dot(h, wh_ref[...], preferred_element_type=jnp.float32) + bh_ref[...]
    logits = head[:, :act_dim]
    value = head[:, act_dim:]

    # actor_logits[~act_mask] = -999999.0 ; softmax(dim=-1)
    valid = mask_ref[...] != 0
    logits = jnp.where(valid, logits, jnp.float32(MASK_FILL))
    m = jnp.max(logits, axis=-1, keepdims=True)
    e = jnp.exp(logits - m)
    probs = e / jnp.sum(e, axis=-1, keepdims=True)

    # Single lane-dense output tile [TB, act_dim + 1]: probs | value.
    out_ref[:, :act_dim] = probs.astype(out_ref.dtype)
    out_ref[:, act_dim:] = value.astype(out_ref.dtype)


def actor_critic_forward(state, act_mask, params, seed=0, block_b=128):
    """state: [B, state_dim] f32, act_mask: [B, act_dim] int32."""
    B, state_dim = state.shape
    act_dim = act_mask.shape[1]
    w1, b1, w2, b2, wa, ba, wc, bc = params
    h0 = w1.shape[1]
    h1 = w2.shape[1]

    # Fuse the actor and critic heads into one [h1, act_dim + 1] weight/bias.
    wh = jnp.concatenate([wa, wc], axis=1)
    bh = jnp.concatenate([ba, bc], axis=1)

    # Batch tiling: tb rows per grid step (multiple of 8 when possible).
    if B >= 8:
        tb = max(8, (min(block_b, B) // 8) * 8)
    else:
        tb = B
    n_tiles = pl.cdiv(B, tb)
    B_pad = n_tiles * tb
    if B_pad != B:
        state = jnp.pad(state, ((0, B_pad - B), (0, 0)))
        act_mask = jnp.pad(act_mask, ((0, B_pad - B), (0, 0)))

    seed_arr = jnp.asarray([seed], dtype=jnp.int32)

    def batch_spec(cols):
        # batch-tiled arrays: slice axis 0 per grid step
        return pl.BlockSpec((tb, cols), lambda i, s: (i, 0))

    def resident_spec(shape):
        # weights/biases: constant block index -> DMA'd once, VMEM-resident
        return pl.BlockSpec(shape, lambda i, s: (0, 0))

    grid_spec = pltpu.PrefetchScalarGridSpec(
        num_scalar_prefetch=1,
        grid=(n_tiles,),
        in_specs=[
            batch_spec(state_dim),                            # state
            batch_spec(act_dim),                              # act_mask
            resident_spec((state_dim, h0)), resident_spec((1, h0)),   # l1
            resident_spec((h0, h1)), resident_spec((1, h1)),          # l2
            resident_spec((h1, act_dim + 1)),                         # actor|critic W
            resident_spec((1, act_dim + 1)),                          # actor|critic b
        ],
        out_specs=batch_spec(act_dim + 1),
    )

    out = pl.pallas_call(
        functools.partial(_actor_critic_kernel, act_dim),
        out_shape=jax.ShapeDtypeStruct((B_pad, act_dim + 1), jnp.float32),
        grid_spec=grid_spec,
        compiler_params=pltpu.CompilerParams(
            dimension_semantics=("parallel",),
        ),
    )(seed_arr, state, act_mask, w1, b1, w2, b2, wh, bh)

    probs = out[:B, :act_dim]
    value = out[:B, act_dim:]
    return probs, value


def init_params(key, state_dim, act_dim, hidden_sizes=(512, 256)):
    """Deterministic synthetic init mirroring nn.Linear shapes.
    Weights are stored pre-transposed: [in_features, out_features]."""
    h0, h1 = hidden_sizes
    ks = jax.random.split(key, 8)

    def lin(kw, kb, fan_in, fan_out):
        bound = 1.0 / jnp.sqrt(fan_in)
        w = jax.random.uniform(kw, (fan_in, fan_out), jnp.float32, -bound, bound)
        b = jax.random.uniform(kb, (1, fan_out), jnp.float32, -bound, bound)
        return w, b

    w1, b1 = lin(ks[0], ks[1], state_dim, h0)
    w2, b2 = lin(ks[2], ks[3], h0, h1)
    wa, ba = lin(ks[4], ks[5], h1, act_dim)
    wc, bc = lin(ks[6], ks[7], h1, 1)
    return (w1, b1, w2, b2, wa, ba, wc, bc)


if __name__ == "__main__":
    key = jax.random.PRNGKey(0)
    k_state, k_mask, k_params = jax.random.split(key, 3)

    B, STATE_DIM, ACT_DIM = 8, 32, 16
    HIDDEN = (512, 256)   # module default hidden_sizes

    state = jax.random.normal(k_state, (B, STATE_DIM), dtype=jnp.float32)
    act_mask = jax.random.bernoulli(k_mask, 0.6, (B, ACT_DIM)).astype(jnp.int32)
    # forward assumes >= 1 valid action per row (as the env guarantees)
    act_mask = act_mask.at[:, 0].set(1)

    params = init_params(k_params, STATE_DIM, ACT_DIM, HIDDEN)

    probs, values = actor_critic_forward(state, act_mask, params, seed=1234)
    jax.block_until_ready((probs, values))

    assert probs.shape == (B, ACT_DIM) and values.shape == (B, 1)
    assert bool(jnp.all(jnp.isfinite(probs))) and bool(jnp.all(jnp.isfinite(values)))
    # probabilities of masked-out actions are ~0, rows sum to 1
    assert bool(jnp.all(jnp.abs(jnp.sum(probs, axis=-1) - 1.0) < 1e-5))
    assert bool(jnp.all(jnp.where(act_mask == 0, probs, 0.0) < 1e-6))

    print("KERNEL_OK")
</pallas_src>

<mosaic_0001>
module attributes {stable_mosaic.version = 11 : i64} {
  func.func @_actor_critic_kernel(%arg0: i32, %arg1: memref<1xi32, #tpu.memory_space<smem>>, %arg2: memref<8x32xf32, #tpu.memory_space<vmem>>, %arg3: memref<8x16xi32, #tpu.memory_space<vmem>>, %arg4: memref<32x512xf32, #tpu.memory_space<vmem>>, %arg5: memref<1x512xf32, #tpu.memory_space<vmem>>, %arg6: memref<512x256xf32, #tpu.memory_space<vmem>>, %arg7: memref<1x256xf32, #tpu.memory_space<vmem>>, %arg8: memref<256x17xf32, #tpu.memory_space<vmem>>, %arg9: memref<1x17xf32, #tpu.memory_space<vmem>>, %arg10: memref<8x17xf32, #tpu.memory_space<vmem>>) attributes {dimension_semantics = [#tpu.dimension_semantics<parallel>], iteration_bounds = array<i64: 1>, scalar_prefetch = 1 : i64, scratch_operands = 0 : i64, tpu.core_type = #tpu.core_type<tc>, window_params = [{transform_indices = @transform_0, window_bounds = array<i64: 8, 32>}, {transform_indices = @transform_1, window_bounds = array<i64: 8, 16>}, {pipeline_mode = #tpu.pipeline_mode<synchronous>, transform_indices = @transform_2, window_bounds = array<i64: 32, 512>}, {pipeline_mode = #tpu.pipeline_mode<synchronous>, transform_indices = @transform_3, window_bounds = array<i64: 1, 512>}, {pipeline_mode = #tpu.pipeline_mode<synchronous>, transform_indices = @transform_4, window_bounds = array<i64: 512, 256>}, {pipeline_mode = #tpu.pipeline_mode<synchronous>, transform_indices = @transform_5, window_bounds = array<i64: 1, 256>}, {pipeline_mode = #tpu.pipeline_mode<synchronous>, transform_indices = @transform_6, window_bounds = array<i64: 256, 17>}, {pipeline_mode = #tpu.pipeline_mode<synchronous>, transform_indices = @transform_7, window_bounds = array<i64: 1, 17>}, {transform_indices = @transform_8, window_bounds = array<i64: 8, 17>}]} {
    %c0 = arith.constant 0 : index
    %0 = memref.load %arg1[%c0] : memref<1xi32, #tpu.memory_space<smem>>
    %1 = arith.addi %0, %arg0 : i32
    %c0_0 = arith.constant 0 : index
    %c0_1 = arith.constant 0 : index
    %2 = vector.load %arg2[%c0_0, %c0_1] : memref<8x32xf32, #tpu.memory_space<vmem>>, vector<8x32xf32>
    %c0_2 = arith.constant 0 : index
    %c0_3 = arith.constant 0 : index
    %3 = vector.load %arg4[%c0_2, %c0_3] : memref<32x512xf32, #tpu.memory_space<vmem>>, vector<32x512xf32>
    %cst = arith.constant dense<0.000000e+00> : vector<8x512xf32>
    %4 = tpu.matmul %2, %3, %cst {dimension_numbers = #tpu.dot_dimension_numbers<[1], [0], [0], [1], [0, 0, 1, 1], [], []>} : vector<8x32xf32>, vector<32x512xf32>, vector<8x512xf32> -> vector<8x512xf32>
    %c0_4 = arith.constant 0 : index
    %c0_5 = arith.constant 0 : index
    %5 = vector.load %arg5[%c0_4, %c0_5] : memref<1x512xf32, #tpu.memory_space<vmem>>, vector<1x512xf32>
    %6 = vector.broadcast %5 : vector<1x512xf32> to vector<8x512xf32>
    %7 = arith.addf %4, %6 : vector<8x512xf32>
    %c-1640531535_i32 = arith.constant -1640531535 : i32
    %8 = arith.muli %1, %c-1640531535_i32 : i32
    %c1_i32 = arith.constant 1 : i32
    %c-2048144777_i32 = arith.constant -2048144777 : i32
    %9 = arith.muli %c1_i32, %c-2048144777_i32 : i32
    %10 = arith.addi %8, %9 : i32
    %11 = tpu.iota {dimensions = array<i32: 0>} : vector<8x512xi32>
    %12 = tpu.iota {dimensions = array<i32: 1>} : vector<8x512xi32>
    %c-1640531527_i32 = arith.constant -1640531527 : i32
    %13 = vector.broadcast %c-1640531527_i32 : i32 to vector<8x512xi32>
    %14 = arith.muli %11, %13 : vector<8x512xi32>
    %15 = vector.broadcast %10 : i32 to vector<8x512xi32>
    %16 = arith.addi %15, %14 : vector<8x512xi32>
    %c-1028477387_i32 = arith.constant -1028477387 : i32
    %17 = vector.broadcast %c-1028477387_i32 : i32 to vector<8x512xi32>
    %18 = arith.muli %12, %17 : vector<8x512xi32>
    %19 = arith.addi %16, %18 : vector<8x512xi32>
    %c16_i32 = arith.constant 16 : i32
    %20 = vector.broadcast %c16_i32 : i32 to vector<8x512xi32>
    %21 = arith.shrui %19, %20 : vector<8x512xi32>
    %22 = arith.xori %19, %21 : vector<8x512xi32>
    %c2146121005_i32 = arith.constant 2146121005 : i32
    %23 = vector.broadcast %c2146121005_i32 : i32 to vector<8x512xi32>
    %24 = arith.muli %22, %23 : vector<8x512xi32>
    %c15_i32 = arith.constant 15 : i32
    %25 = vector.broadcast %c15_i32 : i32 to vector<8x512xi32>
    %26 = arith.shrui %24, %25 : vector<8x512xi32>
    %27 = arith.xori %24, %26 : vector<8x512xi32>
    %c-2073254261_i32 = arith.constant -2073254261 : i32
    %28 = vector.broadcast %c-2073254261_i32 : i32 to vector<8x512xi32>
    %29 = arith.muli %27, %28 : vector<8x512xi32>
    %c16_i32_6 = arith.constant 16 : i32
    %30 = vector.broadcast %c16_i32_6 : i32 to vector<8x512xi32>
    %31 = arith.shrui %29, %30 : vector<8x512xi32>
    %32 = arith.xori %29, %31 : vector<8x512xi32>
    %c31_i32 = arith.constant 31 : i32
    %33 = vector.broadcast %c31_i32 : i32 to vector<8x512xi32>
    %34 = arith.shrui %32, %33 : vector<8x512xi32>
    %c0_i32 = arith.constant 0 : i32
    %35 = vector.broadcast %c0_i32 : i32 to vector<8x512xi32>
    %36 = arith.cmpi eq, %34, %35 : vector<8x512xi32>
    %cst_7 = arith.constant 0.000000e+00 : f32
    %37 = vector.broadcast %cst_7 : f32 to vector<8x512xf32>
    %38 = arith.cmpf ogt, %7, %37 : vector<8x512xf32>
    %39 = math.exp %7 : vector<8x512xf32>
    %cst_8 = arith.constant 1.000000e+00 : f32
    %40 = vector.broadcast %cst_8 : f32 to vector<8x512xf32>
    %41 = arith.subf %39, %40 : vector<8x512xf32>
    %cst_9 = arith.constant 1.67326319 : f32
    %42 = vector.broadcast %cst_9 : f32 to vector<8x512xf32>
    %43 = arith.mulf %42, %41 : vector<8x512xf32>
    %44 = arith.select %38, %7, %43 : vector<8x512xi1>, vector<8x512xf32>
    %cst_10 = arith.constant 2.10140204 : f32
    %45 = vector.broadcast %cst_10 : f32 to vector<8x512xf32>
    %46 = arith.mulf %45, %44 : vector<8x512xf32>
    %cst_11 = arith.constant 0.000000e+00 : f32
    %47 = vector.broadcast %cst_11 : f32 to vector<8x512xf32>
    %48 = arith.select %36, %46, %47 : vector<8x512xi1>, vector<8x512xf32>
    %c0_12 = arith.constant 0 : index
    %c0_13 = arith.constant 0 : index
    %49 = vector.load %arg6[%c0_12, %c0_13] : memref<512x256xf32, #tpu.memory_space<vmem>>, vector<512x256xf32>
    %cst_14 = arith.constant dense<0.000000e+00> : vector<8x256xf32>
    %50 = tpu.matmul %48, %49, %cst_14 {dimension_numbers = #tpu.dot_dimension_numbers<[1], [0], [0], [1], [0, 0, 1, 1], [], []>} : vector<8x512xf32>, vector<512x256xf32>, vector<8x256xf32> -> vector<8x256xf32>
    %c0_15 = arith.constant 0 : index
    %c0_16 = arith.constant 0 : index
    %51 = vector.load %arg7[%c0_15, %c0_16] : memref<1x256xf32, #tpu.memory_space<vmem>>, vector<1x256xf32>
    %52 = vector.broadcast %51 : vector<1x256xf32> to vector<8x256xf32>
    %53 = arith.addf %50, %52 : vector<8x256xf32>
    %c-1640531535_i32_17 = arith.constant -1640531535 : i32
    %54 = arith.muli %1, %c-1640531535_i32_17 : i32
    %c2_i32 = arith.constant 2 : i32
    %c-2048144777_i32_18 = arith.constant -2048144777 : i32
    %55 = arith.muli %c2_i32, %c-2048144777_i32_18 : i32
    %56 = arith.addi %54, %55 : i32
    %57 = tpu.iota {dimensions = array<i32: 0>} : vector<8x256xi32>
    %58 = tpu.iota {dimensions = array<i32: 1>} : vector<8x256xi32>
    %c-1640531527_i32_19 = arith.constant -1640531527 : i32
    %59 = vector.broadcast %c-1640531527_i32_19 : i32 to vector<8x256xi32>
    %60 = arith.muli %57, %59 : vector<8x256xi32>
    %61 = vector.broadcast %56 : i32 to vector<8x256xi32>
    %62 = arith.addi %61, %60 : vector<8x256xi32>
    %c-1028477387_i32_20 = arith.constant -1028477387 : i32
    %63 = vector.broadcast %c-1028477387_i32_20 : i32 to vector<8x256xi32>
    %64 = arith.muli %58, %63 : vector<8x256xi32>
    %65 = arith.addi %62, %64 : vector<8x256xi32>
    %c16_i32_21 = arith.constant 16 : i32
    %66 = vector.broadcast %c16_i32_21 : i32 to vector<8x256xi32>
    %67 = arith.shrui %65, %66 : vector<8x256xi32>
    %68 = arith.xori %65, %67 : vector<8x256xi32>
    %c2146121005_i32_22 = arith.constant 2146121005 : i32
    %69 = vector.broadcast %c2146121005_i32_22 : i32 to vector<8x256xi32>
    %70 = arith.muli %68, %69 : vector<8x256xi32>
    %c15_i32_23 = arith.constant 15 : i32
    %71 = vector.broadcast %c15_i32_23 : i32 to vector<8x256xi32>
    %72 = arith.shrui %70, %71 : vector<8x256xi32>
    %73 = arith.xori %70, %72 : vector<8x256xi32>
    %c-2073254261_i32_24 = arith.constant -2073254261 : i32
    %74 = vector.broadcast %c-2073254261_i32_24 : i32 to vector<8x256xi32>
    %75 = arith.muli %73, %74 : vector<8x256xi32>
    %c16_i32_25 = arith.constant 16 : i32
    %76 = vector.broadcast %c16_i32_25 : i32 to vector<8x256xi32>
    %77 = arith.shrui %75, %76 : vector<8x256xi32>
    %78 = arith.xori %75, %77 : vector<8x256xi32>
    %c31_i32_26 = arith.constant 31 : i32
    %79 = vector.broadcast %c31_i32_26 : i32 to vector<8x256xi32>
    %80 = arith.shrui %78, %79 : vector<8x256xi32>
    %c0_i32_27 = arith.constant 0 : i32
    %81 = vector.broadcast %c0_i32_27 : i32 to vector<8x256xi32>
    %82 = arith.cmpi eq, %80, %81 : vector<8x256xi32>
    %cst_28 = arith.constant 0.000000e+00 : f32
    %83 = vector.broadcast %cst_28 : f32 to vector<8x256xf32>
    %84 = arith.cmpf ogt, %53, %83 : vector<8x256xf32>
    %85 = math.exp %53 : vector<8x256xf32>
    %cst_29 = arith.constant 1.000000e+00 : f32
    %86 = vector.broadcast %cst_29 : f32 to vector<8x256xf32>
    %87 = arith.subf %85, %86 : vector<8x256xf32>
    %cst_30 = arith.constant 1.67326319 : f32
    %88 = vector.broadcast %cst_30 : f32 to vector<8x256xf32>
    %89 = arith.mulf %88, %87 : vector<8x256xf32>
    %90 = arith.select %84, %53, %89 : vector<8x256xi1>, vector<8x256xf32>
    %cst_31 = arith.constant 2.10140204 : f32
    %91 = vector.broadcast %cst_31 : f32 to vector<8x256xf32>
    %92 = arith.mulf %91, %90 : vector<8x256xf32>
    %cst_32 = arith.constant 0.000000e+00 : f32
    %93 = vector.broadcast %cst_32 : f32 to vector<8x256xf32>
    %94 = arith.select %82, %92, %93 : vector<8x256xi1>, vector<8x256xf32>
    %c0_33 = arith.constant 0 : index
    %c0_34 = arith.constant 0 : index
    %95 = vector.load %arg8[%c0_33, %c0_34] : memref<256x17xf32, #tpu.memory_space<vmem>>, vector<256x17xf32>
    %cst_35 = arith.constant dense<0.000000e+00> : vector<8x17xf32>
    %96 = tpu.matmul %94, %95, %cst_35 {dimension_numbers = #tpu.dot_dimension_numbers<[1], [0], [0], [1], [0, 0, 1, 1], [], []>} : vector<8x256xf32>, vector<256x17xf32>, vector<8x17xf32> -> vector<8x17xf32>
    %c0_36 = arith.constant 0 : index
    %c0_37 = arith.constant 0 : index
    %97 = vector.load %arg9[%c0_36, %c0_37] : memref<1x17xf32, #tpu.memory_space<vmem>>, vector<1x17xf32>
    %98 = vector.broadcast %97 : vector<1x17xf32> to vector<8x17xf32>
    %99 = arith.addf %96, %98 : vector<8x17xf32>
    %100 = vector.extract_strided_slice %99 {offsets = [0, 0], sizes = [8, 16], strides = [1, 1]} : vector<8x17xf32> to vector<8x16xf32>
    %101 = vector.extract_strided_slice %99 {offsets = [0, 16], sizes = [8, 1], strides = [1, 1]} : vector<8x17xf32> to vector<8x1xf32>
    %c0_38 = arith.constant 0 : index
    %c0_39 = arith.constant 0 : index
    %102 = vector.load %arg3[%c0_38, %c0_39] : memref<8x16xi32, #tpu.memory_space<vmem>>, vector<8x16xi32>
    %c0_i32_40 = arith.constant 0 : i32
    %103 = vector.broadcast %c0_i32_40 : i32 to vector<8x16xi32>
    %104 = arith.cmpi ne, %102, %103 : vector<8x16xi32>
    %cst_41 = arith.constant -9.999990e+05 : f32
    %105 = vector.broadcast %cst_41 : f32 to vector<8x16xf32>
    %106 = arith.select %104, %100, %105 : vector<8x16xi1>, vector<8x16xf32>
    %cst_42 = arith.constant dense<0xFF800000> : vector<8xf32>
    %107 = vector.multi_reduction <maximumf>, %106, %cst_42 [1] : vector<8x16xf32> to vector<8xf32>
    %108 = vector.shape_cast %107 : vector<8xf32> to vector<8x1xf32>
    %109 = vector.broadcast %108 : vector<8x1xf32> to vector<8x16xf32>
    %110 = arith.subf %106, %109 : vector<8x16xf32>
    %111 = math.exp %110 : vector<8x16xf32>
    %cst_43 = arith.constant dense<0.000000e+00> : vector<8xf32>
    %112 = vector.multi_reduction <add>, %111, %cst_43 [1] : vector<8x16xf32> to vector<8xf32>
    %113 = vector.shape_cast %112 : vector<8xf32> to vector<8x1xf32>
    %114 = vector.broadcast %113 : vector<8x1xf32> to vector<8x16xf32>
    %115 = arith.divf %111, %114 : vector<8x16xf32>
    %c0_44 = arith.constant 0 : index
    %c0_45 = arith.constant 0 : index
    %116 = vector.load %arg10[%c0_44, %c0_45] : memref<8x17xf32, #tpu.memory_space<vmem>>, vector<8x16xf32>
    tpu.vector_store %arg10[%c0_44, %c0_45], %115 {strides = array<i32>} : memref<8x17xf32, #tpu.memory_space<vmem>>, vector<8x16xf32>,
    %c0_46 = arith.constant 0 : index
    %c16 = arith.constant 16 : index
    %117 = vector.load %arg10[%c0_46, %c16] : memref<8x17xf32, #tpu.memory_space<vmem>>, vector<8x1xf32>
    tpu.vector_store %arg10[%c0_46, %c16], %101 {strides = array<i32>} : memref<8x17xf32, #tpu.memory_space<vmem>>, vector<8x1xf32>,
    return
  }
  func.func @transform_0(%arg0: i32, %arg1: memref<1xi32, #tpu.memory_space<smem>>) -> (i32, i32) {
    %c0_i32 = arith.constant 0 : i32
    %c0_i32_0 = arith.constant 0 : i32
    return %arg0, %c0_i32 : i32, i32
  }
  func.func @transform_1(%arg0: i32, %arg1: memref<1xi32, #tpu.memory_space<smem>>) -> (i32, i32) {
    %c0_i32 = arith.constant 0 : i32
    %c0_i32_0 = arith.constant 0 : i32
    return %arg0, %c0_i32 : i32, i32
  }
  func.func @transform_2(%arg0: i32, %arg1: memref<1xi32, #tpu.memory_space<smem>>) -> (i32, i32) {
    %c0_i32 = arith.constant 0 : i32
    %c0_i32_0 = arith.constant 0 : i32
    %c0_i32_1 = arith.constant 0 : i32
    return %c0_i32, %c0_i32_0 : i32, i32
  }
  func.func @transform_3(%arg0: i32, %arg1: memref<1xi32, #tpu.memory_space<smem>>) -> (i32, i32) {
    %c0_i32 = arith.constant 0 : i32
    %c0_i32_0 = arith.constant 0 : i32
    %c0_i32_1 = arith.constant 0 : i32
    return %c0_i32, %c0_i32_0 : i32, i32
  }
  func.func @transform_4(%arg0: i32, %arg1: memref<1xi32, #tpu.memory_space<smem>>) -> (i32, i32) {
    %c0_i32 = arith.constant 0 : i32
    %c0_i32_0 = arith.constant 0 : i32
    %c0_i32_1 = arith.constant 0 : i32
    return %c0_i32, %c0_i32_0 : i32, i32
  }
  func.func @transform_5(%arg0: i32, %arg1: memref<1xi32, #tpu.memory_space<smem>>) -> (i32, i32) {
    %c0_i32 = arith.constant 0 : i32
    %c0_i32_0 = arith.constant 0 : i32
    %c0_i32_1 = arith.constant 0 : i32
    return %c0_i32, %c0_i32_0 : i32, i32
  }
  func.func @transform_6(%arg0: i32, %arg1: memref<1xi32, #tpu.memory_space<smem>>) -> (i32, i32) {
    %c0_i32 = arith.constant 0 : i32
    %c0_i32_0 = arith.constant 0 : i32
    %c0_i32_1 = arith.constant 0 : i32
    return %c0_i32, %c0_i32_0 : i32, i32
  }
  func.func @transform_7(%arg0: i32, %arg1: memref<1xi32, #tpu.memory_space<smem>>) -> (i32, i32) {
    %c0_i32 = arith.constant 0 : i32
    %c0_i32_0 = arith.constant 0 : i32
    %c0_i32_1 = arith.constant 0 : i32
    return %c0_i32, %c0_i32_0 : i32, i32
  }
  func.func @transform_8(%arg0: i32, %arg1: memref<1xi32, #tpu.memory_space<smem>>) -> (i32, i32) {
    %c0_i32 = arith.constant 0 : i32
    %c0_i32_0 = arith.constant 0 : i32
    return %arg0, %c0_i32 : i32, i32
  }
}

</mosaic_0001>

<llo_original>
// kernel: tpu_custom_call.1
$region0: #{tpu_custom_call.1}
  #allocation0 [shape = 'u32[]', space=smem, size = 0x4, offset = 0x4, fixed_abs, tag = 'smem constant byte address 0x4 - core index']
  #allocation1 [shape = 'u32[144,128]{1,0:T(1,128)}', space=vmem, size = 0x12000, scoped, tag = 'internal scratch']
  #allocation2 [shape = 's32[1]{0}', space=sflag, size = 0x4, scoped, tag = 'scoped memory for tpu_custom_call.1']
  #allocation3 [shape = 's32[1]{0:T(128)S(6)}', space=smem, size = 0x200, scoped, tag = 'prefetched SMEM operand 0']
  %s0 = inlined_call_operand.<no memory space> [shape: s32[1], index: 0, kind: input, shape index: {}]
  %s1 = inlined_call_operand.vmem [shape: f32[8,32], index: 1, kind: input, shape index: {}]
  %s2 = inlined_call_operand.vmem [shape: s32[8,16], index: 2, kind: input, shape index: {}]
  %s3 = inlined_call_operand.vmem [shape: f32[32,512], index: 3, kind: input, shape index: {}]
  %s4 = inlined_call_operand.vmem [shape: f32[1,512], index: 4, kind: input, shape index: {}]
  %s5 = inlined_call_operand.hbm [shape: f32[512,256], index: 5, kind: input, shape index: {}]
  %s6 = inlined_call_operand.vmem [shape: f32[1,256], index: 6, kind: input, shape index: {}]
  %s7 = inlined_call_operand.vmem [shape: f32[256,17], index: 7, kind: input, shape index: {}]
  %s8 = inlined_call_operand.vmem [shape: f32[1,17], index: 8, kind: input, shape index: {}]
  %s9 = inlined_call_operand.hbm [shape: f32[8,17], index: 9, kind: output, shape index: {}]
  %s10 = sld [smem:[#allocation0]]
  $region46: #{tpu_custom_call.1} parent=0
    _
  %s12 = ssub.s32 1, %s10
  %s13 = scalar_select 0, %s12, %s10
  %14 = sst [smem:[#allocation3]] %s0
  $region1: #{tpu_custom_call.1} parent=0
    #allocation4 [shape = 'u8[524288]{0}', space=vmem, size = 0x80000, scoped, tag = 'input window, operand 5, single buffered']
    #allocation5 [shape = 's32[1]{0}', space=sflag, size = 0x4, scoped, tag = 'scoped memory for tpu_custom_call.1']
    #allocation6 [shape = 's32[1]{0}', space=sflag, size = 0x4, scoped, tag = 'scoped memory for tpu_custom_call.1']
    #allocation7 [shape = 'u8[4096]{0}', space=vmem, size = 0x1000, scoped, tag = 'output window, operand 0, single buffered']
    %15 = vsyncpa [#allocation5], 0
    %16 = vsyncpa [#allocation6], 0
    // Predicated region
    $region2: #{tpu_custom_call.1} parent=1 // pred_check
      _
    $region3: #{tpu_custom_call.1} parent=1 // pred_check_branch
      %18 = sbr.rel (0) target = $region5
    $region4: #{tpu_custom_call.1} parent=1 // pred_region
      _
    $region5: #{tpu_custom_call.1} parent=1 // pred_fallthru
      _
    // Predicated region
    $region6: #{tpu_custom_call.1} parent=1 // pred_check
      _
    $region7: #{tpu_custom_call.1} parent=1 // pred_check_branch
      %20 = sbr.rel (0) target = $region9
    $region8: #{tpu_custom_call.1} parent=1 // pred_region
      _
    $region9: #{tpu_custom_call.1} parent=1 // pred_fallthru
      _
    // Predicated region
    $region10: #{tpu_custom_call.1} parent=1 // pred_check
      _
    $region11: #{tpu_custom_call.1} parent=1 // pred_check_branch
      %22 = sbr.rel (0) target = $region13
    $region12: #{tpu_custom_call.1} parent=1 // pred_region
      _
    $region13: #{tpu_custom_call.1} parent=1 // pred_fallthru
      _
    // Predicated region
    $region14: #{tpu_custom_call.1} parent=1 // pred_check
      _
    $region15: #{tpu_custom_call.1} parent=1 // pred_check_branch
      %24 = sbr.rel (0) target = $region17
    $region16: #{tpu_custom_call.1} parent=1 // pred_region
      _
    $region17: #{tpu_custom_call.1} parent=1 // pred_fallthru
      _
    // Predicated region
    $region18: #{tpu_custom_call.1} parent=1 // pred_check
      _
    $region19: #{tpu_custom_call.1} parent=1 // pred_check_branch
      %26 = sbr.rel (0) target = $region21
    $region20: #{tpu_custom_call.1} parent=1 // pred_region
      %s28 = ssub.s32 16384, 16384
      %29 = vsyncadd [#allocation5], %s28
      %s30 = sshll.u32 [#allocation4], 4
      %s31 = int_to_ptr.vmem [resolvable:$true] %s30
      %36 = dma.hbm_to_vmem [thread:$0]  %s5, 16384, %s31, [#allocation5], 256, 256, 16
    $region21: #{tpu_custom_call.1} parent=1 // pred_fallthru
      _
    // Predicated region
    $region22: #{tpu_custom_call.1} parent=1 // pred_check
      _
    $region23: #{tpu_custom_call.1} parent=1 // pred_check_branch
      %38 = sbr.rel (0) target = $region25
    $region24: #{tpu_custom_call.1} parent=1 // pred_region
      _
    $region25: #{tpu_custom_call.1} parent=1 // pred_fallthru
      _
    // Predicated region
    $region26: #{tpu_custom_call.1} parent=1 // pred_check
      _
    $region27: #{tpu_custom_call.1} parent=1 // pred_check_branch
      %40 = sbr.rel (0) target = $region29
    $region28: #{tpu_custom_call.1} parent=1 // pred_region
      _
    $region29: #{tpu_custom_call.1} parent=1 // pred_fallthru
      _
    // Predicated region
    $region30: #{tpu_custom_call.1} parent=1 // pred_check
      _
    $region31: #{tpu_custom_call.1} parent=1 // pred_check_branch
      %42 = sbr.rel (0) target = $region33
    $region32: #{tpu_custom_call.1} parent=1 // pred_region
      _
    $region33: #{tpu_custom_call.1} parent=1 // pred_fallthru
      _
    // Predicated region
    $region34: #{tpu_custom_call.1} parent=1 // pred_check
      _
    $region35: #{tpu_custom_call.1} parent=1 // pred_check_branch
      %44 = sbr.rel (0) target = $region37
    $region36: #{tpu_custom_call.1} parent=1 // pred_region
      %45 = dma.done [#allocation5], 16384
    $region37: #{tpu_custom_call.1} parent=1 // pred_fallthru
      _
    %s46 = sld [smem:[#allocation3]]
    %s47 = sadd.s32 %s46, 0
    %v48 = vld [vmem:[%s1] sm:$0xff]
    %v49 = vld [vmem:[%s3] sm:$0xff]
    %v50 = vld [vmem:[%s3 + $0x8] sm:$0xff]
    %v51 = vld [vmem:[%s3 + $0x10] sm:$0xff]
    %v52 = vld [vmem:[%s3 + $0x18] sm:$0xff]
    %v53 = vld [vmem:[%s3 + $0x20] sm:$0xff]
    %v54 = vld [vmem:[%s3 + $0x28] sm:$0xff]
    %v55 = vld [vmem:[%s3 + $0x30] sm:$0xff]
    %v56 = vld [vmem:[%s3 + $0x38] sm:$0xff]
    %v57 = vld [vmem:[%s3 + $0x40] sm:$0xff]
    %v58 = vld [vmem:[%s3 + $0x48] sm:$0xff]
    %v59 = vld [vmem:[%s3 + $0x50] sm:$0xff]
    %v60 = vld [vmem:[%s3 + $0x58] sm:$0xff]
    %v61 = vld [vmem:[%s3 + $0x60] sm:$0xff]
    %v62 = vld [vmem:[%s3 + $0x68] sm:$0xff]
    %v63 = vld [vmem:[%s3 + $0x70] sm:$0xff]
    %v64 = vld [vmem:[%s3 + $0x78] sm:$0xff]
    %v65 = vld [vmem:[%s4] sm:$0xf]
    %v67 = vlaneseq
    %v68 = vshrl.u32 %v67, 7
    %v69 = vsub.s32 0, %v68
    %v70 = vrot.slane %v65, %v69
    %v71 = vlaneseq
    %v72 = vshrl.u32 %v71, 7
    %v73 = vsub.s32 1, %v72
    %v74 = vrot.slane %v65, %v73
    %v75 = vlaneseq
    %v76 = vshrl.u32 %v75, 7
    %v77 = vsub.s32 2, %v76
    %v78 = vrot.slane %v65, %v77
    %v79 = vlaneseq
    %v80 = vshrl.u32 %v79, 7
    %v81 = vsub.s32 3, %v80
    %v82 = vrot.slane %v65, %v81
    %vm87 = vcmask 261120
    %v89 = vsel %vm87, %v48, 0
    %91 = vmatprep.subr.mxu0 %v50
    %92 = vmatpush1.msra.mxu0 %v49
    %93 = vmatprep.subr.mxu0 %v54
    %94 = vmatpush1.msra.mxu0 %v53
    %95 = vmatprep.subr.mxu0 %v58
    %96 = vmatpush1.msra.mxu0 %v57
    %97 = vmatprep.subr.mxu0 %v62
    %98 = vmatpush1.msra.mxu0 %v61
    %99 = vmatprep.subr.mxu0 0.0
    %100 = vmatpush1.msra.mxu0 0.0
    %101 = vmatprep.subr.mxu0 0.0
    %102 = vmatpush1.msra.mxu0 0.0
    %103 = vmatprep.subr.mxu0 0.0
    %104 = vmatpush1.msra.mxu0 0.0
    %105 = vmatprep.subr.mxu0 0.0
    %106 = vmatpush1.msra.mxu0 0.0
    %107 = vmatprep.subr.mxu0 0.0
    %108 = vmatpush1.msra.mxu0 0.0
    %109 = vmatprep.subr.mxu0 0.0
    %110 = vmatpush1.msra.mxu0 0.0
    %111 = vmatprep.subr.mxu0 0.0
    %112 = vmatpush1.msra.mxu0 0.0
    %113 = vmatprep.subr.mxu0 0.0
    %114 = vmatpush1.msra.mxu0 0.0
    %115 = vmatprep.subr.mxu0 0.0
    %116 = vmatpush1.msra.mxu0 0.0
    %117 = vmatprep.subr.mxu0 0.0
    %118 = vmatpush1.msra.mxu0 0.0
    %119 = vmatprep.subr.mxu0 0.0
    %120 = vmatpush1.msra.mxu0 0.0
    %121 = vmatprep.subr.mxu0 0.0
    %122 = vmatpush1.msra.mxu0 0.0
    %123 = vmatprep.subr.mxu0 0.0
    %124 = vmatpush1.msra.mxu0 0.0
    %125 = vmatprep.subr.mxu0 0.0
    %126 = vmatpush1.msra.mxu0 0.0
    %127 = vmatprep.subr.mxu0 0.0
    %128 = vmatpush1.msra.mxu0 0.0
    %129 = vmatprep.subr.mxu0 0.0
    %130 = vmatpush1.msra.mxu0 0.0
    %131 = vmatprep.subr.mxu0 0.0
    %132 = vmatpush1.msra.mxu0 0.0
    %133 = vmatprep.subr.mxu0 0.0
    %134 = vmatpush1.msra.mxu0 0.0
    %135 = vmatprep.subr.mxu0 0.0
    %136 = vmatpush1.msra.mxu0 0.0
    %137 = vmatprep.subr.mxu0 0.0
    %138 = vmatpush1.msra.mxu0 0.0
    %139 = vmatprep.subr.mxu0 0.0
    %140 = vmatpush1.msra.mxu0 0.0
    %141 = vmatprep.subr.mxu0 0.0
    %142 = vmatpush1.msra.mxu0 0.0
    %143 = vmatprep.subr.mxu0 0.0
    %144 = vmatpush1.msra.mxu0 0.0
    %145 = vmatprep.subr.mxu0 0.0
    %146 = vmatpush1.msra.mxu0 0.0
    %147 = vmatprep.subr.mxu0 0.0
    %148 = vmatpush1.msra.mxu0 0.0
    %149 = vmatprep.subr.mxu0 0.0
    %150 = vmatpush1.msra.mxu0 0.0
    %151 = vmatprep.subr.mxu0 0.0
    %152 = vmatpush1.msra.mxu0 0.0
    %153 = vmatprep.subr.mxu0 0.0
    %154 = vmatpush1.msra.mxu0 0.0
    %155 = vmatprep.mubr.f32.mxu0 0.0
    %156 = vmatmul.mubr.f32.gmra.mrb[0].mxu0 %v89
    %v157 = vpop.f32.mrb[0].mxu0
    %v158 = vadd.f32 %v70, %v157
    %v159 = vpop.f32.mrb[0].mxu0
    %v160 = vadd.f32 %v74, %v159
    %161 = vdwg.mxu0
    %162 = vmatprep.subr.mxu0 %v52
    %163 = vmatpush1.msra.mxu0 %v51
    %164 = vmatprep.subr.mxu0 %v56
    %165 = vmatpush1.msra.mxu0 %v55
    %166 = vmatprep.subr.mxu0 %v60
    %167 = vmatpush1.msra.mxu0 %v59
    %168 = vmatprep.subr.mxu0 %v64
    %169 = vmatpush1.msra.mxu0 %v63
    %170 = vmatprep.subr.mxu0 0.0
    %171 = vmatpush1.msra.mxu0 0.0
    %172 = vmatprep.subr.mxu0 0.0
    %173 = vmatpush1.msra.mxu0 0.0
    %174 = vmatprep.subr.mxu0 0.0
    %175 = vmatpush1.msra.mxu0 0.0
    %176 = vmatprep.subr.mxu0 0.0
    %177 = vmatpush1.msra.mxu0 0.0
    %178 = vmatprep.subr.mxu0 0.0
    %179 = vmatpush1.msra.mxu0 0.0
    %180 = vmatprep.subr.mxu0 0.0
    %181 = vmatpush1.msra.mxu0 0.0
    %182 = vmatprep.subr.mxu0 0.0
    %183 = vmatpush1.msra.mxu0 0.0
    %184 = vmatprep.subr.mxu0 0.0
    %185 = vmatpush1.msra.mxu0 0.0
    %186 = vmatprep.subr.mxu0 0.0
    %187 = vmatpush1.msra.mxu0 0.0
    %188 = vmatprep.subr.mxu0 0.0
    %189 = vmatpush1.msra.mxu0 0.0
    %190 = vmatprep.subr.mxu0 0.0
    %191 = vmatpush1.msra.mxu0 0.0
    %192 = vmatprep.subr.mxu0 0.0
    %193 = vmatpush1.msra.mxu0 0.0
    %194 = vmatprep.subr.mxu0 0.0
    %195 = vmatpush1.msra.mxu0 0.0
    %196 = vmatprep.subr.mxu0 0.0
    %197 = vmatpush1.msra.mxu0 0.0
    %198 = vmatprep.subr.mxu0 0.0
    %199 = vmatpush1.msra.mxu0 0.0
    %200 = vmatprep.subr.mxu0 0.0
    %201 = vmatpush1.msra.mxu0 0.0
    %202 = vmatprep.subr.mxu0 0.0
    %203 = vmatpush1.msra.mxu0 0.0
    %204 = vmatprep.subr.mxu0 0.0
    %205 = vmatpush1.msra.mxu0 0.0
    %206 = vmatprep.subr.mxu0 0.0
    %207 = vmatpush1.msra.mxu0 0.0
    %208 = vmatprep.subr.mxu0 0.0
    %209 = vmatpush1.msra.mxu0 0.0
    %210 = vmatprep.subr.mxu0 0.0
    %211 = vmatpush1.msra.mxu0 0.0
    %212 = vmatprep.subr.mxu0 0.0
    %213 = vmatpush1.msra.mxu0 0.0
    %214 = vmatprep.subr.mxu0 0.0
    %215 = vmatpush1.msra.mxu0 0.0
    %216 = vmatprep.subr.mxu0 0.0
    %217 = vmatpush1.msra.mxu0 0.0
    %218 = vmatprep.subr.mxu0 0.0
    %219 = vmatpush1.msra.mxu0 0.0
    %220 = vmatprep.subr.mxu0 0.0
    %221 = vmatpush1.msra.mxu0 0.0
    %222 = vmatprep.subr.mxu0 0.0
    %223 = vmatpush1.msra.mxu0 0.0
    %224 = vmatprep.subr.mxu0 0.0
    %225 = vmatpush1.msra.mxu0 0.0
    %226 = vmatprep.mubr.f32.mxu0 0.0
    %227 = vmatmul.mubr.f32.gmra.mrb[0].mxu0 %v89
    %v228 = vpop.f32.mrb[0].mxu0
    %v229 = vadd.f32 %v78, %v228
    %v230 = vpop.f32.mrb[0].mxu0
    %v231 = vadd.f32 %v82, %v230
    %232 = vdwg.mxu0
    %s233 = smul.u32 %s47, 2654435761
    %s234 = sadd.s32 %s233, 2246822519
    %v235 = vlaneseq
    %v236 = vshrl.u32 %v235, 7
    %v237 = vlaneseq
    %v238 = vand.u32 %v237, 127
    %v239 = vadd.s32 %v238, 128
    %v240 = vadd.s32 %v238, 256
    %v241 = vadd.s32 %v238, 384
    %v242 = vmul.u32 %v236, 2654435769
    %v243 = vstv %s234
    %v244 = vadd.s32 %v243, %v242
    %v245 = vmul.u32 %v238, 3266489909
    %v246 = vmul.u32 %v239, 3266489909
    %v247 = vmul.u32 %v240, 3266489909
    %v248 = vmul.u32 %v241, 3266489909
    %v249 = vadd.s32 %v244, %v245
    %v250 = vadd.s32 %v244, %v246
    %v251 = vadd.s32 %v244, %v247
    %v252 = vadd.s32 %v244, %v248
    %v253 = vshrl.u32 %v249, 16
    %v254 = vshrl.u32 %v250, 16
    %v255 = vshrl.u32 %v251, 16
    %v256 = vshrl.u32 %v252, 16
    %v257 = vxor.u32 %v249, %v253
    %v258 = vxor.u32 %v250, %v254
    %v259 = vxor.u32 %v251, %v255
    %v260 = vxor.u32 %v252, %v256
    %v261 = vmul.u32 %v257, 2146121005
    %v262 = vmul.u32 %v258, 2146121005
    %v263 = vmul.u32 %v259, 2146121005
    %v264 = vmul.u32 %v260, 2146121005
    %v265 = vshrl.u32 %v261, 15
    %v266 = vshrl.u32 %v262, 15
    %v267 = vshrl.u32 %v263, 15
    %v268 = vshrl.u32 %v264, 15
    %v269 = vxor.u32 %v261, %v265
    %v270 = vxor.u32 %v262, %v266
    %v271 = vxor.u32 %v263, %v267
    %v272 = vxor.u32 %v264, %v268
    %v273 = vmul.u32 %v269, 2221713035
    %v274 = vmul.u32 %v270, 2221713035
    %v275 = vmul.u32 %v271, 2221713035
    %v276 = vmul.u32 %v272, 2221713035
    %v277 = vshrl.u32 %v273, 16
    %v278 = vshrl.u32 %v274, 16
    %v279 = vshrl.u32 %v275, 16
    %v280 = vshrl.u32 %v276, 16
    %v281 = vxor.u32 %v273, %v277
    %v282 = vxor.u32 %v274, %v278
    %v283 = vxor.u32 %v275, %v279
    %v284 = vxor.u32 %v276, %v280
    %v285 = vshrl.u32 %v281, 31
    %v286 = vshrl.u32 %v282, 31
    %v287 = vshrl.u32 %v283, 31
    %v288 = vshrl.u32 %v284, 31
    %vm289 = vcmp.eq.s32.totalorder %v285, 0
    %vm290 = vcmp.eq.s32.totalorder %v286, 0
    %vm291 = vcmp.eq.s32.totalorder %v287, 0
    %vm292 = vcmp.eq.s32.totalorder %v288, 0
    %vm293 = vcmp.gt.f32.partialorder %v158, 0.0
    %vm294 = vcmp.gt.f32.partialorder %v160, 0.0
    %vm295 = vcmp.gt.f32.partialorder %v229, 0.0
    %vm296 = vcmp.gt.f32.partialorder %v231, 0.0
    %v297 = vmul.f32 %v158, 1.442695
    %v298 = vpow.pop %v297
    %v299 = vmul.f32 %v160, 1.442695
    %v300 = vpow.pop %v299
    %v301 = vmul.f32 %v229, 1.442695
    %v302 = vpow.pop %v301
    %v303 = vmul.f32 %v231, 1.442695
    %v304 = vpow.pop %v303
    %v305 = vsub.f32 %v298, 1.0
    %v306 = vsub.f32 %v300, 1.0
    %v307 = vsub.f32 %v302, 1.0
    %v308 = vsub.f32 %v304, 1.0
    %v309 = vmul.f32 %v305, 1.6732632
    %v310 = vmul.f32 %v306, 1.6732632
    %v311 = vmul.f32 %v307, 1.6732632
    %v312 = vmul.f32 %v308, 1.6732632
    %v313 = vsel %vm293, %v158, %v309
    %v314 = vsel %vm294, %v160, %v310
    %v315 = vsel %vm295, %v229, %v311
    %v316 = vsel %vm296, %v231, %v312
    %v317 = vmul.f32 %v313, 2.101402
    %v318 = vmul.f32 %v314, 2.101402
    %v319 = vmul.f32 %v315, 2.101402
    %v320 = vmul.f32 %v316, 2.101402
    %v321 = vsel %vm289, %v317, 0.0
    %v322 = vsel %vm290, %v318, 0.0
    %v323 = vsel %vm291, %v319, 0.0
    %v324 = vsel %vm292, %v320, 0.0
    %v325 = vld [vmem:[#allocation4] sm:$0xff]
    %v326 = vld [vmem:[#allocation4 + $0x8] sm:$0xff]
    %v327 = vld [vmem:[#allocation4 + $0x10] sm:$0xff]
    %v328 = vld [vmem:[#allocation4 + $0x18] sm:$0xff]
    %v329 = vld [vmem:[#allocation4 + $0x20] sm:$0xff]
    %v330 = vld [vmem:[#allocation4 + $0x28] sm:$0xff]
    %v331 = vld [vmem:[#allocation4 + $0x30] sm:$0xff]
    %v332 = vld [vmem:[#allocation4 + $0x38] sm:$0xff]
    %v333 = vld [vmem:[#allocation4 + $0x40] sm:$0xff]
    %v334 = vld [vmem:[#allocation4 + $0x48] sm:$0xff]
    %v335 = vld [vmem:[#allocation4 + $0x50] sm:$0xff]
    %v336 = vld [vmem:[#allocation4 + $0x58] sm:$0xff]
    %v337 = vld [vmem:[#allocation4 + $0x60] sm:$0xff]
    %v338 = vld [vmem:[#allocation4 + $0x68] sm:$0xff]
    %v339 = vld [vmem:[#allocation4 + $0x70] sm:$0xff]
    %v340 = vld [vmem:[#allocation4 + $0x78] sm:$0xff]
    %v341 = vld [vmem:[#allocation4 + $0x80] sm:$0xff]
    %v342 = vld [vmem:[#allocation4 + $0x88] sm:$0xff]
    %v343 = vld [vmem:[#allocation4 + $0x90] sm:$0xff]
    %v344 = vld [vmem:[#allocation4 + $0x98] sm:$0xff]
    %v345 = vld [vmem:[#allocation4 + $0xa0] sm:$0xff]
    %v346 = vld [vmem:[#allocation4 + $0xa8] sm:$0xff]
    %v347 = vld [vmem:[#allocation4 + $0xb0] sm:$0xff]
    %v348 = vld [vmem:[#allocation4 + $0xb8] sm:$0xff]
    %v349 = vld [vmem:[#allocation4 + $0xc0] sm:$0xff]
    %v350 = vld [vmem:[#allocation4 + $0xc8] sm:$0xff]
    %v351 = vld [vmem:[#allocation4 + $0xd0] sm:$0xff]
    %v352 = vld [vmem:[#allocation4 + $0xd8] sm:$0xff]
    %v353 = vld [vmem:[#allocation4 + $0xe0] sm:$0xff]
    %v354 = vld [vmem:[#allocation4 + $0xe8] sm:$0xff]
    %v355 = vld [vmem:[#allocation4 + $0xf0] sm:$0xff]
    %v356 = vld [vmem:[#allocation4 + $0xf8] sm:$0xff]
    %v357 = vld [vmem:[#allocation4 + $0x100] sm:$0xff]
    %v358 = vld [vmem:[#allocation4 + $0x108] sm:$0xff]
    %v359 = vld [vmem:[#allocation4 + $0x110] sm:$0xff]
    %v360 = vld [vmem:[#allocation4 + $0x118] sm:$0xff]
    %v361 = vld [vmem:[#allocation4 + $0x120] sm:$0xff]
    %v362 = vld [vmem:[#allocation4 + $0x128] sm:$0xff]
    %v363 = vld [vmem:[#allocation4 + $0x130] sm:$0xff]
    %v364 = vld [vmem:[#allocation4 + $0x138] sm:$0xff]
    %v365 = vld [vmem:[#allocation4 + $0x140] sm:$0xff]
    %v366 = vld [vmem:[#allocation4 + $0x148] sm:$0xff]
    %v367 = vld [vmem:[#allocation4 + $0x150] sm:$0xff]
    %v368 = vld [vmem:[#allocation4 + $0x158] sm:$0xff]
    %v369 = vld [vmem:[#allocation4 + $0x160] sm:$0xff]
    %v370 = vld [vmem:[#allocation4 + $0x168] sm:$0xff]
    %v371 = vld [vmem:[#allocation4 + $0x170] sm:$0xff]
    %v372 = vld [vmem:[#allocation4 + $0x178] sm:$0xff]
    %v373 = vld [vmem:[#allocation4 + $0x180] sm:$0xff]
    %v374 = vld [vmem:[#allocation4 + $0x188] sm:$0xff]
    %v375 = vld [vmem:[#allocation4 + $0x190] sm:$0xff]
    %v376 = vld [vmem:[#allocation4 + $0x198] sm:$0xff]
    %v377 = vld [vmem:[#allocation4 + $0x1a0] sm:$0xff]
    %v378 = vld [vmem:[#allocation4 + $0x1a8] sm:$0xff]
    %v379 = vld [vmem:[#allocation4 + $0x1b0] sm:$0xff]
    %v380 = vld [vmem:[#allocation4 + $0x1b8] sm:$0xff]
    %v381 = vld [vmem:[#allocation4 + $0x1c0] sm:$0xff]
    %v382 = vld [vmem:[#allocation4 + $0x1c8] sm:$0xff]
    %v383 = vld [vmem:[#allocation4 + $0x1d0] sm:$0xff]
    %v384 = vld [vmem:[#allocation4 + $0x1d8] sm:$0xff]
    %v385 = vld [vmem:[#allocation4 + $0x1e0] sm:$0xff]
    %v386 = vld [vmem:[#allocation4 + $0x1e8] sm:$0xff]
    %v387 = vld [vmem:[#allocation4 + $0x1f0] sm:$0xff]
    %v388 = vld [vmem:[#allocation4 + $0x1f8] sm:$0xff]
    %v389 = vld [vmem:[#allocation4 + $0x200] sm:$0xff]
    %v390 = vld [vmem:[#allocation4 + $0x208] sm:$0xff]
    %v391 = vld [vmem:[#allocation4 + $0x210] sm:$0xff]
    %v392 = vld [vmem:[#allocation4 + $0x218] sm:$0xff]
    %v393 = vld [vmem:[#allocation4 + $0x220] sm:$0xff]
    %v394 = vld [vmem:[#allocation4 + $0x228] sm:$0xff]
    %v395 = vld [vmem:[#allocation4 + $0x230] sm:$0xff]
    %v396 = vld [vmem:[#allocation4 + $0x238] sm:$0xff]
    %v397 = vld [vmem:[#allocation4 + $0x240] sm:$0xff]
    %v398 = vld [vmem:[#allocation4 + $0x248] sm:$0xff]
    %v399 = vld [vmem:[#allocation4 + $0x250] sm:$0xff]
    %v400 = vld [vmem:[#allocation4 + $0x258] sm:$0xff]
    %v401 = vld [vmem:[#allocation4 + $0x260] sm:$0xff]
    %v402 = vld [vmem:[#allocation4 + $0x268] sm:$0xff]
    %v403 = vld [vmem:[#allocation4 + $0x270] sm:$0xff]
    %v404 = vld [vmem:[#allocation4 + $0x278] sm:$0xff]
    %v405 = vld [vmem:[#allocation4 + $0x280] sm:$0xff]
    %v406 = vld [vmem:[#allocation4 + $0x288] sm:$0xff]
    %v407 = vld [vmem:[#allocation4 + $0x290] sm:$0xff]
    %v408 = vld [vmem:[#allocation4 + $0x298] sm:$0xff]
    %v409 = vld [vmem:[#allocation4 + $0x2a0] sm:$0xff]
    %v410 = vld [vmem:[#allocation4 + $0x2a8] sm:$0xff]
    %v411 = vld [vmem:[#allocation4 + $0x2b0] sm:$0xff]
    %v412 = vld [vmem:[#allocation4 + $0x2b8] sm:$0xff]
    %v413 = vld [vmem:[#allocation4 + $0x2c0] sm:$0xff]
    %v414 = vld [vmem:[#allocation4 + $0x2c8] sm:$0xff]
    %v415 = vld [vmem:[#allocation4 + $0x2d0] sm:$0xff]
    %v416 = vld [vmem:[#allocation4 + $0x2d8] sm:$0xff]
    %v417 = vld [vmem:[#allocation4 + $0x2e0] sm:$0xff]
    %v418 = vld [vmem:[#allocation4 + $0x2e8] sm:$0xff]
    %v419 = vld [vmem:[#allocation4 + $0x2f0] sm:$0xff]
    %v420 = vld [vmem:[#allocation4 + $0x2f8] sm:$0xff]
    %v421 = vld [vmem:[#allocation4 + $0x300] sm:$0xff]
    %v422 = vld [vmem:[#allocation4 + $0x308] sm:$0xff]
    %v423 = vld [vmem:[#allocation4 + $0x310] sm:$0xff]
    %v424 = vld [vmem:[#allocation4 + $0x318] sm:$0xff]
    %v425 = vld [vmem:[#allocation4 + $0x320] sm:$0xff]
    %v426 = vld [vmem:[#allocation4 + $0x328] sm:$0xff]
    %v427 = vld [vmem:[#allocation4 + $0x330] sm:$0xff]
    %v428 = vld [vmem:[#allocation4 + $0x338] sm:$0xff]
    %v429 = vld [vmem:[#allocation4 + $0x340] sm:$0xff]
    %v430 = vld [vmem:[#allocation4 + $0x348] sm:$0xff]
    %v431 = vld [vmem:[#allocation4 + $0x350] sm:$0xff]
    %v432 = vld [vmem:[#allocation4 + $0x358] sm:$0xff]
    %v433 = vld [vmem:[#allocation4 + $0x360] sm:$0xff]
    %v434 = vld [vmem:[#allocation4 + $0x368] sm:$0xff]
    %v435 = vld [vmem:[#allocation4 + $0x370] sm:$0xff]
    %v436 = vld [vmem:[#allocation4 + $0x378] sm:$0xff]
    %v437 = vld [vmem:[#allocation4 + $0x380] sm:$0xff]
    %v438 = vld [vmem:[#allocation4 + $0x388] sm:$0xff]
    %v439 = vld [vmem:[#allocation4 + $0x390] sm:$0xff]
    %v440 = vld [vmem:[#allocation4 + $0x398] sm:$0xff]
    %v441 = vld [vmem:[#allocation4 + $0x3a0] sm:$0xff]
    %v442 = vld [vmem:[#allocation4 + $0x3a8] sm:$0xff]
    %v443 = vld [vmem:[#allocation4 + $0x3b0] sm:$0xff]
    %v444 = vld [vmem:[#allocation4 + $0x3b8] sm:$0xff]
    %v445 = vld [vmem:[#allocation4 + $0x3c0] sm:$0xff]
    %v446 = vld [vmem:[#allocation4 + $0x3c8] sm:$0xff]
    %v447 = vld [vmem:[#allocation4 + $0x3d0] sm:$0xff]
    %v448 = vld [vmem:[#allocation4 + $0x3d8] sm:$0xff]
    %v449 = vld [vmem:[#allocation4 + $0x3e0] sm:$0xff]
    %v450 = vld [vmem:[#allocation4 + $0x3e8] sm:$0xff]
    %v451 = vld [vmem:[#allocation4 + $0x3f0] sm:$0xff]
    %v452 = vld [vmem:[#allocation4 + $0x3f8] sm:$0xff]
    %v453 = vld [vmem:[%s6] sm:$0x3]
    %v455 = vlaneseq
    %v456 = vshrl.u32 %v455, 7
    %v457 = vsub.s32 0, %v456
    %v458 = vrot.slane %v453, %v457
    %v459 = vlaneseq
    %v460 = vshrl.u32 %v459, 7
    %v461 = vsub.s32 1, %v460
    %v462 = vrot.slane %v453, %v461
    %465 = vmatprep.subr.mxu0 %v326
    %466 = vmatpush1.msra.mxu0 %v325
    %467 = vmatprep.subr.mxu0 %v328
    %468 = vmatpush1.msra.mxu0 %v327
    %469 = vmatprep.subr.mxu0 %v330
    %470 = vmatpush1.msra.mxu0 %v329
    %471 = vmatprep.subr.mxu0 %v332
    %472 = vmatpush1.msra.mxu0 %v331
    %473 = vmatprep.subr.mxu0 %v334
    %474 = vmatpush1.msra.mxu0 %v333
    %475 = vmatprep.subr.mxu0 %v336
    %476 = vmatpush1.msra.mxu0 %v335
    %477 = vmatprep.subr.mxu0 %v338
    %478 = vmatpush1.msra.mxu0 %v337
    %479 = vmatprep.subr.mxu0 %v340
    %480 = vmatpush1.msra.mxu0 %v339
    %481 = vmatprep.subr.mxu0 %v342
    %482 = vmatpush1.msra.mxu0 %v341
    %483 = vmatprep.subr.mxu0 %v344
    %484 = vmatpush1.msra.mxu0 %v343
    %485 = vmatprep.subr.mxu0 %v346
    %486 = vmatpush1.msra.mxu0 %v345
    %487 = vmatprep.subr.mxu0 %v348
    %488 = vmatpush1.msra.mxu0 %v347
    %489 = vmatprep.subr.mxu0 %v350
    %490 = vmatpush1.msra.mxu0 %v349
    %491 = vmatprep.subr.mxu0 %v352
    %492 = vmatpush1.msra.mxu0 %v351
    %493 = vmatprep.subr.mxu0 %v354
    %494 = vmatpush1.msra.mxu0 %v353
    %495 = vmatprep.subr.mxu0 %v356
    %496 = vmatpush1.msra.mxu0 %v355
    %497 = vmatprep.subr.mxu0 %v358
    %498 = vmatpush1.msra.mxu0 %v357
    %499 = vmatprep.subr.mxu0 %v360
    %500 = vmatpush1.msra.mxu0 %v359
    %501 = vmatprep.subr.mxu0 %v362
    %502 = vmatpush1.msra.mxu0 %v361
    %503 = vmatprep.subr.mxu0 %v364
    %504 = vmatpush1.msra.mxu0 %v363
    %505 = vmatprep.subr.mxu0 %v366
    %506 = vmatpush1.msra.mxu0 %v365
    %507 = vmatprep.subr.mxu0 %v368
    %508 = vmatpush1.msra.mxu0 %v367
    %509 = vmatprep.subr.mxu0 %v370
    %510 = vmatpush1.msra.mxu0 %v369
    %511 = vmatprep.subr.mxu0 %v372
    %512 = vmatpush1.msra.mxu0 %v371
    %513 = vmatprep.subr.mxu0 %v374
    %514 = vmatpush1.msra.mxu0 %v373
    %515 = vmatprep.subr.mxu0 %v376
    %516 = vmatpush1.msra.mxu0 %v375
    %517 = vmatprep.subr.mxu0 %v378
    %518 = vmatpush1.msra.mxu0 %v377
    %519 = vmatprep.subr.mxu0 %v380
    %520 = vmatpush1.msra.mxu0 %v379
    %521 = vmatprep.subr.mxu0 %v382
    %522 = vmatpush1.msra.mxu0 %v381
    %523 = vmatprep.subr.mxu0 %v384
    %524 = vmatpush1.msra.mxu0 %v383
    %525 = vmatprep.subr.mxu0 %v386
    %526 = vmatpush1.msra.mxu0 %v385
    %527 = vmatprep.subr.mxu0 %v388
    %528 = vmatpush1.msra.mxu0 %v387
    %529 = vmatprep.mubr.f32.mxu0 %v322
    %530 = vmatmul.mubr.f32.gmra.mrb[0].mxu0 %v321
    %v531 = vpop.f32.mrb[0].mxu0
    %v532 = vadd.f32 %v458, %v531
    %v533 = vpop.f32.mrb[0].mxu0
    %v534 = vadd.f32 %v462, %v533
    %535 = vdwg.mxu0
    %536 = vmatprep.subr.mxu0 %v390
    %537 = vmatpush1.msra.mxu0 %v389
    %538 = vmatprep.subr.mxu0 %v392
    %539 = vmatpush1.msra.mxu0 %v391
    %540 = vmatprep.subr.mxu0 %v394
    %541 = vmatpush1.msra.mxu0 %v393
    %542 = vmatprep.subr.mxu0 %v396
    %543 = vmatpush1.msra.mxu0 %v395
    %544 = vmatprep.subr.mxu0 %v398
    %545 = vmatpush1.msra.mxu0 %v397
    %546 = vmatprep.subr.mxu0 %v400
    %547 = vmatpush1.msra.mxu0 %v399
    %548 = vmatprep.subr.mxu0 %v402
    %549 = vmatpush1.msra.mxu0 %v401
    %550 = vmatprep.subr.mxu0 %v404
    %551 = vmatpush1.msra.mxu0 %v403
    %552 = vmatprep.subr.mxu0 %v406
    %553 = vmatpush1.msra.mxu0 %v405
    %554 = vmatprep.subr.mxu0 %v408
    %555 = vmatpush1.msra.mxu0 %v407
    %556 = vmatprep.subr.mxu0 %v410
    %557 = vmatpush1.msra.mxu0 %v409
    %558 = vmatprep.subr.mxu0 %v412
    %559 = vmatpush1.msra.mxu0 %v411
    %560 = vmatprep.subr.mxu0 %v414
    %561 = vmatpush1.msra.mxu0 %v413
    %562 = vmatprep.subr.mxu0 %v416
    %563 = vmatpush1.msra.mxu0 %v415
    %564 = vmatprep.subr.mxu0 %v418
    %565 = vmatpush1.msra.mxu0 %v417
    %566 = vmatprep.subr.mxu0 %v420
    %567 = vmatpush1.msra.mxu0 %v419
    %568 = vmatprep.subr.mxu0 %v422
    %569 = vmatpush1.msra.mxu0 %v421
    %570 = vmatprep.subr.mxu0 %v424
    %571 = vmatpush1.msra.mxu0 %v423
    %572 = vmatprep.subr.mxu0 %v426
    %573 = vmatpush1.msra.mxu0 %v425
    %574 = vmatprep.subr.mxu0 %v428
    %575 = vmatpush1.msra.mxu0 %v427
    %576 = vmatprep.subr.mxu0 %v430
    %577 = vmatpush1.msra.mxu0 %v429
    %578 = vmatprep.subr.mxu0 %v432
    %579 = vmatpush1.msra.mxu0 %v431
    %580 = vmatprep.subr.mxu0 %v434
    %581 = vmatpush1.msra.mxu0 %v433
    %582 = vmatprep.subr.mxu0 %v436
    %583 = vmatpush1.msra.mxu0 %v435
    %584 = vmatprep.subr.mxu0 %v438
    %585 = vmatpush1.msra.mxu0 %v437
    %586 = vmatprep.subr.mxu0 %v440
    %587 = vmatpush1.msra.mxu0 %v439
    %588 = vmatprep.subr.mxu0 %v442
    %589 = vmatpush1.msra.mxu0 %v441
    %590 = vmatprep.subr.mxu0 %v444
    %591 = vmatpush1.msra.mxu0 %v443
    %592 = vmatprep.subr.mxu0 %v446
    %593 = vmatpush1.msra.mxu0 %v445
    %594 = vmatprep.subr.mxu0 %v448
    %595 = vmatpush1.msra.mxu0 %v447
    %596 = vmatprep.subr.mxu0 %v450
    %597 = vmatpush1.msra.mxu0 %v449
    %598 = vmatprep.subr.mxu0 %v452
    %599 = vmatpush1.msra.mxu0 %v451
    %600 = vmatprep.mubr.f32.mxu0 %v324
    %601 = vmatmul.mubr.f32.gmra.mrb[0].mxu0 %v323
    %v602 = vpop.f32.mrb[0].mxu0
    %v603 = vadd.f32 %v532, %v602
    %v604 = vpop.f32.mrb[0].mxu0
    %v605 = vadd.f32 %v534, %v604
    %606 = vdwg.mxu0
    %s607 = sadd.s32 %s233, 198677742
    %v608 = vstv %s607
    %v609 = vadd.s32 %v608, %v242
    %v610 = vadd.s32 %v609, %v245
    %v611 = vadd.s32 %v609, %v246
    %v612 = vshrl.u32 %v610, 16
    %v613 = vshrl.u32 %v611, 16
    %v614 = vxor.u32 %v610, %v612
    %v615 = vxor.u32 %v611, %v613
    %v616 = vmul.u32 %v614, 2146121005
    %v617 = vmul.u32 %v615, 2146121005
    %v618 = vshrl.u32 %v616, 15
    %v619 = vshrl.u32 %v617, 15
    %v620 = vxor.u32 %v616, %v618
    %v621 = vxor.u32 %v617, %v619
    %v622 = vmul.u32 %v620, 2221713035
    %v623 = vmul.u32 %v621, 2221713035
    %v624 = vshrl.u32 %v622, 16
    %v625 = vshrl.u32 %v623, 16
    %v626 = vxor.u32 %v622, %v624
    %v627 = vxor.u32 %v623, %v625
    %v628 = vshrl.u32 %v626, 31
    %v629 = vshrl.u32 %v627, 31
    %vm630 = vcmp.eq.s32.totalorder %v628, 0
    %vm631 = vcmp.eq.s32.totalorder %v629, 0
    %vm632 = vcmp.gt.f32.partialorder %v603, 0.0
    %vm633 = vcmp.gt.f32.partialorder %v605, 0.0
    %v634 = vmul.f32 %v603, 1.442695
    %v635 = vpow.pop %v634
    %v636 = vmul.f32 %v605, 1.442695
    %v637 = vpow.pop %v636
    %v638 = vsub.f32 %v635, 1.0
    %v639 = vsub.f32 %v637, 1.0
    %v640 = vmul.f32 %v638, 1.6732632
    %v641 = vmul.f32 %v639, 1.6732632
    %v642 = vsel %vm632, %v603, %v640
    %v643 = vsel %vm633, %v605, %v641
    %v644 = vmul.f32 %v642, 2.101402
    %v645 = vmul.f32 %v643, 2.101402
    %v646 = vsel %vm630, %v644, 0.0
    %v647 = vsel %vm631, %v645, 0.0
    %v648 = vld [vmem:[%s7] sm:$0xff]
    %v649 = vld [vmem:[%s7 + $0x8] sm:$0xff]
    %v650 = vld [vmem:[%s7 + $0x10] sm:$0xff]
    %v651 = vld [vmem:[%s7 + $0x18] sm:$0xff]
    %v652 = vld [vmem:[%s7 + $0x20] sm:$0xff]
    %v653 = vld [vmem:[%s7 + $0x28] sm:$0xff]
    %v654 = vld [vmem:[%s7 + $0x30] sm:$0xff]
    %v655 = vld [vmem:[%s7 + $0x38] sm:$0xff]
    %v656 = vld [vmem:[%s7 + $0x40] sm:$0xff]
    %v657 = vld [vmem:[%s7 + $0x48] sm:$0xff]
    %v658 = vld [vmem:[%s7 + $0x50] sm:$0xff]
    %v659 = vld [vmem:[%s7 + $0x58] sm:$0xff]
    %v660 = vld [vmem:[%s7 + $0x60] sm:$0xff]
    %v661 = vld [vmem:[%s7 + $0x68] sm:$0xff]
    %v662 = vld [vmem:[%s7 + $0x70] sm:$0xff]
    %v663 = vld [vmem:[%s7 + $0x78] sm:$0xff]
    %v664 = vld [vmem:[%s7 + $0x80] sm:$0xff]
    %v665 = vld [vmem:[%s7 + $0x88] sm:$0xff]
    %v666 = vld [vmem:[%s7 + $0x90] sm:$0xff]
    %v667 = vld [vmem:[%s7 + $0x98] sm:$0xff]
    %v668 = vld [vmem:[%s7 + $0xa0] sm:$0xff]
    %v669 = vld [vmem:[%s7 + $0xa8] sm:$0xff]
    %v670 = vld [vmem:[%s7 + $0xb0] sm:$0xff]
    %v671 = vld [vmem:[%s7 + $0xb8] sm:$0xff]
    %v672 = vld [vmem:[%s7 + $0xc0] sm:$0xff]
    %v673 = vld [vmem:[%s7 + $0xc8] sm:$0xff]
    %v674 = vld [vmem:[%s7 + $0xd0] sm:$0xff]
    %v675 = vld [vmem:[%s7 + $0xd8] sm:$0xff]
    %v676 = vld [vmem:[%s7 + $0xe0] sm:$0xff]
    %v677 = vld [vmem:[%s7 + $0xe8] sm:$0xff]
    %v678 = vld [vmem:[%s7 + $0xf0] sm:$0xff]
    %v679 = vld [vmem:[%s7 + $0xf8] sm:$0xff]
    %v680 = vld [vmem:[%s8] sm:$0x1]
    %v682 = vlaneseq
    %v683 = vshrl.u32 %v682, 7
    %v684 = vsub.s32 0, %v683
    %v685 = vrot.slane %v680, %v684
    %687 = vmatprep.subr.mxu0 0.0
    %688 = vmatpush1.msra.mxu0 %v648
    %689 = vmatprep.subr.mxu0 0.0
    %690 = vmatpush1.msra.mxu0 %v649
    %691 = vmatprep.subr.mxu0 0.0
    %692 = vmatpush1.msra.mxu0 %v650
    %693 = vmatprep.subr.mxu0 0.0
    %694 = vmatpush1.msra.mxu0 %v651
    %695 = vmatprep.subr.mxu0 0.0
    %696 = vmatpush1.msra.mxu0 %v652
    %697 = vmatprep.subr.mxu0 0.0
    %698 = vmatpush1.msra.mxu0 %v653
    %699 = vmatprep.subr.mxu0 0.0
    %700 = vmatpush1.msra.mxu0 %v654
    %701 = vmatprep.subr.mxu0 0.0
    %702 = vmatpush1.msra.mxu0 %v655
    %703 = vmatprep.subr.mxu0 0.0
    %704 = vmatpush1.msra.mxu0 %v656
    %705 = vmatprep.subr.mxu0 0.0
    %706 = vmatpush1.msra.mxu0 %v657
    %707 = vmatprep.subr.mxu0 0.0
    %708 = vmatpush1.msra.mxu0 %v658
    %709 = vmatprep.subr.mxu0 0.0
    %710 = vmatpush1.msra.mxu0 %v659
    %711 = vmatprep.subr.mxu0 0.0
    %712 = vmatpush1.msra.mxu0 %v660
    %713 = vmatprep.subr.mxu0 0.0
    %714 = vmatpush1.msra.mxu0 %v661
    %715 = vmatprep.subr.mxu0 0.0
    %716 = vmatpush1.msra.mxu0 %v662
    %717 = vmatprep.subr.mxu0 0.0
    %718 = vmatpush1.msra.mxu0 %v663
    %719 = vmatprep.subr.mxu0 0.0
    %720 = vmatpush1.msra.mxu0 %v664
    %721 = vmatprep.subr.mxu0 0.0
    %722 = vmatpush1.msra.mxu0 %v665
    %723 = vmatprep.subr.mxu0 0.0
    %724 = vmatpush1.msra.mxu0 %v666
    %725 = vmatprep.subr.mxu0 0.0
    %726 = vmatpush1.msra.mxu0 %v667
    %727 = vmatprep.subr.mxu0 0.0
    %728 = vmatpush1.msra.mxu0 %v668
    %729 = vmatprep.subr.mxu0 0.0
    %730 = vmatpush1.msra.mxu0 %v669
    %731 = vmatprep.subr.mxu0 0.0
    %732 = vmatpush1.msra.mxu0 %v670
    %733 = vmatprep.subr.mxu0 0.0
    %734 = vmatpush1.msra.mxu0 %v671
    %735 = vmatprep.subr.mxu0 0.0
    %736 = vmatpush1.msra.mxu0 %v672
    %737 = vmatprep.subr.mxu0 0.0
    %738 = vmatpush1.msra.mxu0 %v673
    %739 = vmatprep.subr.mxu0 0.0
    %740 = vmatpush1.msra.mxu0 %v674
    %741 = vmatprep.subr.mxu0 0.0
    %742 = vmatpush1.msra.mxu0 %v675
    %743 = vmatprep.subr.mxu0 0.0
    %744 = vmatpush1.msra.mxu0 %v676
    %745 = vmatprep.subr.mxu0 0.0
    %746 = vmatpush1.msra.mxu0 %v677
    %747 = vmatprep.subr.mxu0 0.0
    %748 = vmatpush1.msra.mxu0 %v678
    %749 = vmatprep.subr.mxu0 0.0
    %750 = vmatpush1.msra.mxu0 %v679
    %751 = vmatprep.mubr.f32.mxu0 %v647
    %752 = vmatmul.mubr.f32.gmra.mrb[0].mxu0 %v646
    %v753 = vpop.f32.mrb[0].mxu0
    %v754 = vadd.f32 %v685, %v753
    %v755 = vpop.f32.mrb[0].mxu0
    %756 = vdwg.mxu0
    %v757 = vld [vmem:[%s2] sm:$0xff]
    %vm758 = vcmp.ne.s32.totalorder %v757, 0
    %v759 = vsel %vm758, %v754, -999999.0
    %vm760 = vcmask 130048
    %v761 = vsel %vm760, %v759, -inf
    %762 = vmax.xlane.f32.xlu0 %v761
    %v763 = vpop.xlane.xlu0 %762
    %v764 = vsub.f32 %v759, %v763
    %v765 = vmul.f32 %v764, 1.442695
    %v766 = vpow.pop %v765
    %v767 = vsel %vm760, %v766, 0.0
    %768 = vadd.xlane.f32.xlu0 %v767
    %v769 = vpop.xlane.xlu0 %768
    %v770 = vrcp.pop %v769
    %v771 = vmul.f32 %v766, %v770
    %772 = vst.msk [vmem:[#allocation7] sm:$0xff] %vm760, %v771
    %vm773 = vcmask 138368
    %774 = vst.msk [vmem:[#allocation7] sm:$0xff] %vm773, %v754
    // Predicated region
    $region38: #{tpu_custom_call.1} parent=1 // pred_check
      _
    $region39: #{tpu_custom_call.1} parent=1 // pred_check_branch
      %776 = sbr.rel (0) target = $region41
    $region40: #{tpu_custom_call.1} parent=1 // pred_region
      %s778 = ssub.s32 128, 128
      %779 = vsyncadd [#allocation6], %s778
      %s781 = sshll.u32 [#allocation7], 4
      %s782 = int_to_ptr.vmem [resolvable:$true] %s781
      %784 = dma.vmem_to_hbm [thread:$0]  %s782, 128, %s9, [#allocation6]
    $region41: #{tpu_custom_call.1} parent=1 // pred_fallthru
      _
    // Predicated region
    $region42: #{tpu_custom_call.1} parent=1 // pred_check
      _
    $region43: #{tpu_custom_call.1} parent=1 // pred_check_branch
      %786 = sbr.rel (0) target = $region45
    $region44: #{tpu_custom_call.1} parent=1 // pred_region
      %787 = dma.done [#allocation6], 128
    $region45: #{tpu_custom_call.1} parent=1 // pred_fallthru
      _
    %788 = vsyncpa [#allocation5], 1
    %789 = vsyncpa [#allocation6], 1

</llo_original>
